<compile_context>
chip_gen: v6e
topology: v6e:2x2x1
jax: 0.10.0
libtpu: 0.0.40
codegen_flags: <defaults>
</compile_context>

<pallas_src>
import jax
import jax.numpy as jnp
from jax.experimental import pallas as pl
from jax.experimental.pallas import tpu as pltpu


def _round_up(x, m):
    return ((x + m - 1) // m) * m


def aae_forward_kernel(x_ref,
                       w1_ref, b1_ref, w2_ref, b2_ref, w3_ref, b3_ref,
                       w4_ref, b4_ref, w5_ref, b5_ref, w6_ref, b6_ref,
                       out_ref, lat_ref):
    x = x_ref[...]

    # ---- encoder ----
    h = jnp.dot(x, w1_ref[...], preferred_element_type=jnp.float32) + b1_ref[...]
    h = jnp.maximum(h, 0.0)                                  # Dropout(eval)=id, ReLU
    h = jnp.dot(h, w2_ref[...], preferred_element_type=jnp.float32) + b2_ref[...]
    h = jnp.maximum(h, 0.0)
    latent = jnp.dot(h, w3_ref[...], preferred_element_type=jnp.float32) + b3_ref[...]
    lat_ref[...] = latent.astype(lat_ref.dtype)

    # ---- decoder ----
    d = jnp.dot(latent, w4_ref[...], preferred_element_type=jnp.float32) + b4_ref[...]
    d = jnp.maximum(d, 0.0)
    d = jnp.dot(d, w5_ref[...], preferred_element_type=jnp.float32) + b5_ref[...]
    d = jnp.maximum(d, 0.0)
    logits = jnp.dot(d, w6_ref[...], preferred_element_type=jnp.float32) + b6_ref[...]
    out_ref[...] = jax.nn.sigmoid(logits).astype(out_ref.dtype)


def aae_forward(x_nchw, params, *, ninput, nhidden, nlatent, block_rows=512):
    """x_nchw: (N, C, H, W). Returns (output (B, ninput), latent (B, nlatent))."""
    x = x_nchw.reshape(-1, ninput).astype(jnp.float32)   # == input.view(-1, ninput)
    B = x.shape[0]

    # ---- lane-dense padded feature widths (multiples of 128) ----
    ninput_p = _round_up(ninput, 128)
    nhidden_p = _round_up(nhidden, 128)
    nlatent_p = _round_up(nlatent, 128)

    # ---- batch tiling: TB rows per grid step (multiple of 8 sublanes) ----
    TB = min(block_rows, _round_up(B, 8))
    Bp = _round_up(B, TB)
    n_tiles = Bp // TB

    # ---- pad activations / weights with zeros (inert columns/rows) ----
    x_p = jnp.zeros((Bp, ninput_p), jnp.float32).at[:B, :ninput].set(x)

    dims = [(ninput, nhidden), (nhidden, nhidden), (nhidden, nlatent),
            (nlatent, nhidden), (nhidden, nhidden), (nhidden, ninput)]
    dims_p = [(ninput_p, nhidden_p), (nhidden_p, nhidden_p), (nhidden_p, nlatent_p),
              (nlatent_p, nhidden_p), (nhidden_p, nhidden_p), (nhidden_p, ninput_p)]

    flat_args = [x_p]
    param_specs = []
    for (w, b), (di, do), (dip, dop) in zip(params, dims, dims_p):
        w_p = jnp.zeros((dip, dop), jnp.float32).at[:di, :do].set(w)
        b_p = jnp.zeros((1, dop), jnp.float32).at[:, :do].set(b)
        flat_args.append(w_p)
        flat_args.append(b_p)
        # Constant block index -> loaded once, stays VMEM-resident across steps.
        param_specs.append(pl.BlockSpec((dip, dop), lambda i: (0, 0)))
        param_specs.append(pl.BlockSpec((1, dop), lambda i: (0, 0)))

    x_spec = pl.BlockSpec((TB, ninput_p), lambda i: (i, 0))
    out_specs = (pl.BlockSpec((TB, ninput_p), lambda i: (i, 0)),
                 pl.BlockSpec((TB, nlatent_p), lambda i: (i, 0)))
    out_shape = (jax.ShapeDtypeStruct((Bp, ninput_p), jnp.float32),
                 jax.ShapeDtypeStruct((Bp, nlatent_p), jnp.float32))

    # Advisory cost estimate (real, unpadded math).
    flops = 2 * B * (2 * ninput * nhidden + 2 * nhidden * nhidden + 2 * nhidden * nlatent)
    weight_bytes = 4 * sum(dip * dop + dop for (dip, dop) in dims_p)
    bytes_accessed = 4 * Bp * (2 * ninput_p + nlatent_p) + weight_bytes
    cost = pl.CostEstimate(flops=flops,
                           transcendentals=B * ninput,
                           bytes_accessed=bytes_accessed)

    fn = pl.pallas_call(
        aae_forward_kernel,
        out_shape=out_shape,
        grid=(n_tiles,),
        in_specs=[x_spec] + param_specs,
        out_specs=out_specs,
        compiler_params=pltpu.CompilerParams(
            dimension_semantics=("parallel",),      # v7x: split batch tiles across TCs
            vmem_limit_bytes=64 * 1024 * 1024,
        ),
        cost_estimate=cost,
    )
    out_p, lat_p = fn(*flat_args)
    # Drop batch padding and inert lane padding.
    return out_p[:B, :ninput], lat_p[:B, :nlatent]


def init_linear(key, fan_in, fan_out):
    """Deterministic init mirroring nn.Linear default: U(-1/sqrt(fan_in), 1/sqrt(fan_in)).
    Stored as (in, out) so the kernel does x @ W + b."""
    kw, kb = jax.random.split(key)
    bound = 1.0 / jnp.sqrt(jnp.float32(fan_in))
    w = jax.random.uniform(kw, (fan_in, fan_out), jnp.float32, -bound, bound)
    b = jax.random.uniform(kb, (1, fan_out), jnp.float32, -bound, bound)
    return w, b


if __name__ == "__main__":
    # Small shapes consistent with the module: input flattened to ninput features.
    N, C, H, W = 4, 1, 8, 8          # input.view(-1, ninput) -> (4, 64)
    ninput = C * H * W               # 64
    nhidden = 32
    nlatent = 16

    key = jax.random.PRNGKey(0)
    keys = jax.random.split(key, 8)

    x = jax.random.uniform(keys[0], (N, C, H, W), jnp.float32)  # data in [0,1)

    params = [
        init_linear(keys[1], ninput, nhidden),    # encoder L1
        init_linear(keys[2], nhidden, nhidden),   # encoder L2
        init_linear(keys[3], nhidden, nlatent),   # encoder L3
        init_linear(keys[4], nlatent, nhidden),   # decoder L1
        init_linear(keys[5], nhidden, nhidden),   # decoder L2
        init_linear(keys[6], nhidden, ninput),    # decoder L3
    ]

    output, latent = aae_forward(x, params, ninput=ninput, nhidden=nhidden,
                                 nlatent=nlatent)
    jax.block_until_ready((output, latent))

    assert output.shape == (N, ninput) and latent.shape == (N, nlatent)
    assert bool(jnp.all((output >= 0.0) & (output <= 1.0)))

    # Pure-JAX reference check.
    def ref_forward(x_nchw):
        h = x_nchw.reshape(-1, ninput)
        (w1, b1), (w2, b2), (w3, b3), (w4, b4), (w5, b5), (w6, b6) = params
        h1 = jnp.maximum(h @ w1 + b1, 0.0)
        h2 = jnp.maximum(h1 @ w2 + b2, 0.0)
        lat = h2 @ w3 + b3
        d1 = jnp.maximum(lat @ w4 + b4, 0.0)
        d2 = jnp.maximum(d1 @ w5 + b5, 0.0)
        out = jax.nn.sigmoid(d2 @ w6 + b6)
        return out, lat

    ref_out, ref_lat = ref_forward(x)
    assert jnp.allclose(output, ref_out, atol=1e-5, rtol=1e-5)
    assert jnp.allclose(latent, ref_lat, atol=1e-5, rtol=1e-5)

    print("KERNEL_OK")
</pallas_src>

<mosaic_0001>
module attributes {stable_mosaic.version = 11 : i64} {
  func.func @aae_forward_kernel(%arg0: i32, %arg1: memref<8x128xf32, #tpu.memory_space<vmem>>, %arg2: memref<128x128xf32, #tpu.memory_space<vmem>>, %arg3: memref<1x128xf32, #tpu.memory_space<vmem>>, %arg4: memref<128x128xf32, #tpu.memory_space<vmem>>, %arg5: memref<1x128xf32, #tpu.memory_space<vmem>>, %arg6: memref<128x128xf32, #tpu.memory_space<vmem>>, %arg7: memref<1x128xf32, #tpu.memory_space<vmem>>, %arg8: memref<128x128xf32, #tpu.memory_space<vmem>>, %arg9: memref<1x128xf32, #tpu.memory_space<vmem>>, %arg10: memref<128x128xf32, #tpu.memory_space<vmem>>, %arg11: memref<1x128xf32, #tpu.memory_space<vmem>>, %arg12: memref<128x128xf32, #tpu.memory_space<vmem>>, %arg13: memref<1x128xf32, #tpu.memory_space<vmem>>, %arg14: memref<8x128xf32, #tpu.memory_space<vmem>>, %arg15: memref<8x128xf32, #tpu.memory_space<vmem>>) attributes {dimension_semantics = [#tpu.dimension_semantics<parallel>], iteration_bounds = array<i64: 1>, scalar_prefetch = 0 : i64, scratch_operands = 0 : i64, tpu.core_type = #tpu.core_type<tc>, window_params = [{transform_indices = @transform_0, window_bounds = array<i64: 8, 128>}, {pipeline_mode = #tpu.pipeline_mode<synchronous>, transform_indices = @transform_1, window_bounds = array<i64: 128, 128>}, {pipeline_mode = #tpu.pipeline_mode<synchronous>, transform_indices = @transform_2, window_bounds = array<i64: 1, 128>}, {pipeline_mode = #tpu.pipeline_mode<synchronous>, transform_indices = @transform_3, window_bounds = array<i64: 128, 128>}, {pipeline_mode = #tpu.pipeline_mode<synchronous>, transform_indices = @transform_4, window_bounds = array<i64: 1, 128>}, {pipeline_mode = #tpu.pipeline_mode<synchronous>, transform_indices = @transform_5, window_bounds = array<i64: 128, 128>}, {pipeline_mode = #tpu.pipeline_mode<synchronous>, transform_indices = @transform_6, window_bounds = array<i64: 1, 128>}, {pipeline_mode = #tpu.pipeline_mode<synchronous>, transform_indices = @transform_7, window_bounds = array<i64: 128, 128>}, {pipeline_mode = #tpu.pipeline_mode<synchronous>, transform_indices = @transform_8, window_bounds = array<i64: 1, 128>}, {pipeline_mode = #tpu.pipeline_mode<synchronous>, transform_indices = @transform_9, window_bounds = array<i64: 128, 128>}, {pipeline_mode = #tpu.pipeline_mode<synchronous>, transform_indices = @transform_10, window_bounds = array<i64: 1, 128>}, {pipeline_mode = #tpu.pipeline_mode<synchronous>, transform_indices = @transform_11, window_bounds = array<i64: 128, 128>}, {pipeline_mode = #tpu.pipeline_mode<synchronous>, transform_indices = @transform_12, window_bounds = array<i64: 1, 128>}, {transform_indices = @transform_13, window_bounds = array<i64: 8, 128>}, {transform_indices = @transform_14, window_bounds = array<i64: 8, 128>}]} {
    %c0 = arith.constant 0 : index
    %c0_0 = arith.constant 0 : index
    %0 = vector.load %arg1[%c0, %c0_0] : memref<8x128xf32, #tpu.memory_space<vmem>>, vector<8x128xf32>
    %c0_1 = arith.constant 0 : index
    %c0_2 = arith.constant 0 : index
    %1 = vector.load %arg2[%c0_1, %c0_2] : memref<128x128xf32, #tpu.memory_space<vmem>>, vector<128x128xf32>
    %cst = arith.constant dense<0.000000e+00> : vector<8x128xf32>
    %2 = tpu.matmul %0, %1, %cst {dimension_numbers = #tpu.dot_dimension_numbers<[1], [0], [0], [1], [0, 0, 1, 1], [], []>} : vector<8x128xf32>, vector<128x128xf32>, vector<8x128xf32> -> vector<8x128xf32>
    %c0_3 = arith.constant 0 : index
    %c0_4 = arith.constant 0 : index
    %3 = vector.load %arg3[%c0_3, %c0_4] : memref<1x128xf32, #tpu.memory_space<vmem>>, vector<1x128xf32>
    %4 = vector.broadcast %3 : vector<1x128xf32> to vector<8x128xf32>
    %5 = arith.addf %2, %4 : vector<8x128xf32>
    %cst_5 = arith.constant 0.000000e+00 : f32
    %6 = vector.broadcast %cst_5 : f32 to vector<8x128xf32>
    %7 = arith.maximumf %5, %6 : vector<8x128xf32>
    %c0_6 = arith.constant 0 : index
    %c0_7 = arith.constant 0 : index
    %8 = vector.load %arg4[%c0_6, %c0_7] : memref<128x128xf32, #tpu.memory_space<vmem>>, vector<128x128xf32>
    %cst_8 = arith.constant dense<0.000000e+00> : vector<8x128xf32>
    %9 = tpu.matmul %7, %8, %cst_8 {dimension_numbers = #tpu.dot_dimension_numbers<[1], [0], [0], [1], [0, 0, 1, 1], [], []>} : vector<8x128xf32>, vector<128x128xf32>, vector<8x128xf32> -> vector<8x128xf32>
    %c0_9 = arith.constant 0 : index
    %c0_10 = arith.constant 0 : index
    %10 = vector.load %arg5[%c0_9, %c0_10] : memref<1x128xf32, #tpu.memory_space<vmem>>, vector<1x128xf32>
    %11 = vector.broadcast %10 : vector<1x128xf32> to vector<8x128xf32>
    %12 = arith.addf %9, %11 : vector<8x128xf32>
    %cst_11 = arith.constant 0.000000e+00 : f32
    %13 = vector.broadcast %cst_11 : f32 to vector<8x128xf32>
    %14 = arith.maximumf %12, %13 : vector<8x128xf32>
    %c0_12 = arith.constant 0 : index
    %c0_13 = arith.constant 0 : index
    %15 = vector.load %arg6[%c0_12, %c0_13] : memref<128x128xf32, #tpu.memory_space<vmem>>, vector<128x128xf32>
    %cst_14 = arith.constant dense<0.000000e+00> : vector<8x128xf32>
    %16 = tpu.matmul %14, %15, %cst_14 {dimension_numbers = #tpu.dot_dimension_numbers<[1], [0], [0], [1], [0, 0, 1, 1], [], []>} : vector<8x128xf32>, vector<128x128xf32>, vector<8x128xf32> -> vector<8x128xf32>
    %c0_15 = arith.constant 0 : index
    %c0_16 = arith.constant 0 : index
    %17 = vector.load %arg7[%c0_15, %c0_16] : memref<1x128xf32, #tpu.memory_space<vmem>>, vector<1x128xf32>
    %18 = vector.broadcast %17 : vector<1x128xf32> to vector<8x128xf32>
    %19 = arith.addf %16, %18 : vector<8x128xf32>
    %c0_17 = arith.constant 0 : index
    %c0_18 = arith.constant 0 : index
    %20 = vector.load %arg15[%c0_17, %c0_18] : memref<8x128xf32, #tpu.memory_space<vmem>>, vector<8x128xf32>
    tpu.vector_store %arg15[%c0_17, %c0_18], %19 {strides = array<i32>} : memref<8x128xf32, #tpu.memory_space<vmem>>, vector<8x128xf32>,
    %c0_19 = arith.constant 0 : index
    %c0_20 = arith.constant 0 : index
    %21 = vector.load %arg8[%c0_19, %c0_20] : memref<128x128xf32, #tpu.memory_space<vmem>>, vector<128x128xf32>
    %cst_21 = arith.constant dense<0.000000e+00> : vector<8x128xf32>
    %22 = tpu.matmul %19, %21, %cst_21 {dimension_numbers = #tpu.dot_dimension_numbers<[1], [0], [0], [1], [0, 0, 1, 1], [], []>} : vector<8x128xf32>, vector<128x128xf32>, vector<8x128xf32> -> vector<8x128xf32>
    %c0_22 = arith.constant 0 : index
    %c0_23 = arith.constant 0 : index
    %23 = vector.load %arg9[%c0_22, %c0_23] : memref<1x128xf32, #tpu.memory_space<vmem>>, vector<1x128xf32>
    %24 = vector.broadcast %23 : vector<1x128xf32> to vector<8x128xf32>
    %25 = arith.addf %22, %24 : vector<8x128xf32>
    %cst_24 = arith.constant 0.000000e+00 : f32
    %26 = vector.broadcast %cst_24 : f32 to vector<8x128xf32>
    %27 = arith.maximumf %25, %26 : vector<8x128xf32>
    %c0_25 = arith.constant 0 : index
    %c0_26 = arith.constant 0 : index
    %28 = vector.load %arg10[%c0_25, %c0_26] : memref<128x128xf32, #tpu.memory_space<vmem>>, vector<128x128xf32>
    %cst_27 = arith.constant dense<0.000000e+00> : vector<8x128xf32>
    %29 = tpu.matmul %27, %28, %cst_27 {dimension_numbers = #tpu.dot_dimension_numbers<[1], [0], [0], [1], [0, 0, 1, 1], [], []>} : vector<8x128xf32>, vector<128x128xf32>, vector<8x128xf32> -> vector<8x128xf32>
    %c0_28 = arith.constant 0 : index
    %c0_29 = arith.constant 0 : index
    %30 = vector.load %arg11[%c0_28, %c0_29] : memref<1x128xf32, #tpu.memory_space<vmem>>, vector<1x128xf32>
    %31 = vector.broadcast %30 : vector<1x128xf32> to vector<8x128xf32>
    %32 = arith.addf %29, %31 : vector<8x128xf32>
    %cst_30 = arith.constant 0.000000e+00 : f32
    %33 = vector.broadcast %cst_30 : f32 to vector<8x128xf32>
    %34 = arith.maximumf %32, %33 : vector<8x128xf32>
    %c0_31 = arith.constant 0 : index
    %c0_32 = arith.constant 0 : index
    %35 = vector.load %arg12[%c0_31, %c0_32] : memref<128x128xf32, #tpu.memory_space<vmem>>, vector<128x128xf32>
    %cst_33 = arith.constant dense<0.000000e+00> : vector<8x128xf32>
    %36 = tpu.matmul %34, %35, %cst_33 {dimension_numbers = #tpu.dot_dimension_numbers<[1], [0], [0], [1], [0, 0, 1, 1], [], []>} : vector<8x128xf32>, vector<128x128xf32>, vector<8x128xf32> -> vector<8x128xf32>
    %c0_34 = arith.constant 0 : index
    %c0_35 = arith.constant 0 : index
    %37 = vector.load %arg13[%c0_34, %c0_35] : memref<1x128xf32, #tpu.memory_space<vmem>>, vector<1x128xf32>
    %38 = vector.broadcast %37 : vector<1x128xf32> to vector<8x128xf32>
    %39 = arith.addf %36, %38 : vector<8x128xf32>
    %40 = arith.negf %39 : vector<8x128xf32>
    %41 = math.exp %40 : vector<8x128xf32>
    %cst_36 = arith.constant 1.000000e+00 : f32
    %42 = vector.broadcast %cst_36 : f32 to vector<8x128xf32>
    %43 = arith.addf %42, %41 : vector<8x128xf32>
    %44 = arith.divf %42, %43 : vector<8x128xf32>
    %c0_37 = arith.constant 0 : index
    %c0_38 = arith.constant 0 : index
    %45 = vector.load %arg14[%c0_37, %c0_38] : memref<8x128xf32, #tpu.memory_space<vmem>>, vector<8x128xf32>
    tpu.vector_store %arg14[%c0_37, %c0_38], %44 {strides = array<i32>} : memref<8x128xf32, #tpu.memory_space<vmem>>, vector<8x128xf32>,
    return
  }
  func.func @transform_0(%arg0: i32) -> (i32, i32) {
    %c0_i32 = arith.constant 0 : i32
    %c0_i32_0 = arith.constant 0 : i32
    return %arg0, %c0_i32 : i32, i32
  }
  func.func @transform_1(%arg0: i32) -> (i32, i32) {
    %c0_i32 = arith.constant 0 : i32
    %c0_i32_0 = arith.constant 0 : i32
    %c0_i32_1 = arith.constant 0 : i32
    return %c0_i32, %c0_i32_0 : i32, i32
  }
  func.func @transform_2(%arg0: i32) -> (i32, i32) {
    %c0_i32 = arith.constant 0 : i32
    %c0_i32_0 = arith.constant 0 : i32
    %c0_i32_1 = arith.constant 0 : i32
    return %c0_i32, %c0_i32_0 : i32, i32
  }
  func.func @transform_3(%arg0: i32) -> (i32, i32) {
    %c0_i32 = arith.constant 0 : i32
    %c0_i32_0 = arith.constant 0 : i32
    %c0_i32_1 = arith.constant 0 : i32
    return %c0_i32, %c0_i32_0 : i32, i32
  }
  func.func @transform_4(%arg0: i32) -> (i32, i32) {
    %c0_i32 = arith.constant 0 : i32
    %c0_i32_0 = arith.constant 0 : i32
    %c0_i32_1 = arith.constant 0 : i32
    return %c0_i32, %c0_i32_0 : i32, i32
  }
  func.func @transform_5(%arg0: i32) -> (i32, i32) {
    %c0_i32 = arith.constant 0 : i32
    %c0_i32_0 = arith.constant 0 : i32
    %c0_i32_1 = arith.constant 0 : i32
    return %c0_i32, %c0_i32_0 : i32, i32
  }
  func.func @transform_6(%arg0: i32) -> (i32, i32) {
    %c0_i32 = arith.constant 0 : i32
    %c0_i32_0 = arith.constant 0 : i32
    %c0_i32_1 = arith.constant 0 : i32
    return %c0_i32, %c0_i32_0 : i32, i32
  }
  func.func @transform_7(%arg0: i32) -> (i32, i32) {
    %c0_i32 = arith.constant 0 : i32
    %c0_i32_0 = arith.constant 0 : i32
    %c0_i32_1 = arith.constant 0 : i32
    return %c0_i32, %c0_i32_0 : i32, i32
  }
  func.func @transform_8(%arg0: i32) -> (i32, i32) {
    %c0_i32 = arith.constant 0 : i32
    %c0_i32_0 = arith.constant 0 : i32
    %c0_i32_1 = arith.constant 0 : i32
    return %c0_i32, %c0_i32_0 : i32, i32
  }
  func.func @transform_9(%arg0: i32) -> (i32, i32) {
    %c0_i32 = arith.constant 0 : i32
    %c0_i32_0 = arith.constant 0 : i32
    %c0_i32_1 = arith.constant 0 : i32
    return %c0_i32, %c0_i32_0 : i32, i32
  }
  func.func @transform_10(%arg0: i32) -> (i32, i32) {
    %c0_i32 = arith.constant 0 : i32
    %c0_i32_0 = arith.constant 0 : i32
    %c0_i32_1 = arith.constant 0 : i32
    return %c0_i32, %c0_i32_0 : i32, i32
  }
  func.func @transform_11(%arg0: i32) -> (i32, i32) {
    %c0_i32 = arith.constant 0 : i32
    %c0_i32_0 = arith.constant 0 : i32
    %c0_i32_1 = arith.constant 0 : i32
    return %c0_i32, %c0_i32_0 : i32, i32
  }
  func.func @transform_12(%arg0: i32) -> (i32, i32) {
    %c0_i32 = arith.constant 0 : i32
    %c0_i32_0 = arith.constant 0 : i32
    %c0_i32_1 = arith.constant 0 : i32
    return %c0_i32, %c0_i32_0 : i32, i32
  }
  func.func @transform_13(%arg0: i32) -> (i32, i32) {
    %c0_i32 = arith.constant 0 : i32
    %c0_i32_0 = arith.constant 0 : i32
    return %arg0, %c0_i32 : i32, i32
  }
  func.func @transform_14(%arg0: i32) -> (i32, i32) {
    %c0_i32 = arith.constant 0 : i32
    %c0_i32_0 = arith.constant 0 : i32
    return %arg0, %c0_i32 : i32, i32
  }
}

</mosaic_0001>

<llo_original>
// kernel: tpu_custom_call.1
$region0: #{tpu_custom_call.1}
  #allocation0 [shape = 'u32[]', space=smem, size = 0x4, offset = 0x4, fixed_abs, tag = 'smem constant byte address 0x4 - core index']
  #allocation1 [shape = 'u32[144,128]{1,0:T(1,128)}', space=vmem, size = 0x12000, scoped, tag = 'internal scratch']
  %s0 = inlined_call_operand.hbm [shape: f32[8,128], index: 0, kind: input, shape index: {}]
  %s1 = inlined_call_operand.hbm [shape: f32[128,128], index: 1, kind: input, shape index: {}]
  %s2 = inlined_call_operand.vmem [shape: f32[1,128], index: 2, kind: input, shape index: {}]
  %s3 = inlined_call_operand.hbm [shape: f32[128,128], index: 3, kind: input, shape index: {}]
  %s4 = inlined_call_operand.vmem [shape: f32[1,128], index: 4, kind: input, shape index: {}]
  %s5 = inlined_call_operand.hbm [shape: f32[128,128], index: 5, kind: input, shape index: {}]
  %s6 = inlined_call_operand.vmem [shape: f32[1,128], index: 6, kind: input, shape index: {}]
  %s7 = inlined_call_operand.hbm [shape: f32[128,128], index: 7, kind: input, shape index: {}]
  %s8 = inlined_call_operand.vmem [shape: f32[1,128], index: 8, kind: input, shape index: {}]
  %s9 = inlined_call_operand.hbm [shape: f32[128,128], index: 9, kind: input, shape index: {}]
  %s10 = inlined_call_operand.vmem [shape: f32[1,128], index: 10, kind: input, shape index: {}]
  %s11 = inlined_call_operand.hbm [shape: f32[128,128], index: 11, kind: input, shape index: {}]
  %s12 = inlined_call_operand.vmem [shape: f32[1,128], index: 12, kind: input, shape index: {}]
  %s13 = inlined_call_operand.hbm [shape: f32[8,128], index: 13, kind: output, shape index: {0}]
  %s14 = inlined_call_operand.hbm [shape: f32[8,128], index: 14, kind: output, shape index: {1}]
  %15 = xla_tuple %s13, %s14
  %s16 = sld [smem:[#allocation0]]
  $region98: #{tpu_custom_call.1} parent=0
    _
  %s18 = ssub.s32 1, %s16
  %s19 = scalar_select 0, %s18, %s16
  $region1: #{tpu_custom_call.1} parent=0
    #allocation2 [shape = 'u8[4096]{0}', space=vmem, size = 0x1000, scoped, tag = 'input window, operand 0, single buffered']
    #allocation3 [shape = 's32[1]{0}', space=sflag, size = 0x4, scoped, tag = 'scoped memory for tpu_custom_call.1']
    #allocation4 [shape = 's32[1]{0}', space=sflag, size = 0x4, scoped, tag = 'scoped memory for tpu_custom_call.1']
    #allocation5 [shape = 'u8[65536]{0}', space=vmem, size = 0x10000, scoped, tag = 'input window, operand 1, single buffered']
    #allocation6 [shape = 's32[1]{0}', space=sflag, size = 0x4, scoped, tag = 'scoped memory for tpu_custom_call.1']
    #allocation7 [shape = 'u8[65536]{0}', space=vmem, size = 0x10000, scoped, tag = 'input window, operand 3, single buffered']
    #allocation8 [shape = 'u8[65536]{0}', space=vmem, size = 0x10000, scoped, tag = 'input window, operand 5, single buffered']
    #allocation9 [shape = 's32[1]{0}', space=sflag, size = 0x4, scoped, tag = 'scoped memory for tpu_custom_call.1']
    #allocation10 [shape = 'u8[65536]{0}', space=vmem, size = 0x10000, scoped, tag = 'input window, operand 7, single buffered']
    #allocation11 [shape = 'u8[65536]{0}', space=vmem, size = 0x10000, scoped, tag = 'input window, operand 9, single buffered']
    #allocation12 [shape = 's32[1]{0}', space=sflag, size = 0x4, scoped, tag = 'scoped memory for tpu_custom_call.1']
    #allocation13 [shape = 'u8[65536]{0}', space=vmem, size = 0x10000, scoped, tag = 'input window, operand 11, single buffered']
    #allocation14 [shape = 'u8[4096]{0}', space=vmem, size = 0x1000, scoped, tag = 'output window, operand 0, single buffered']
    #allocation15 [shape = 'u8[4096]{0}', space=vmem, size = 0x1000, scoped, tag = 'output window, operand 1, single buffered']
    #allocation16 [shape = 's32[1]{0}', space=sflag, size = 0x4, scoped, tag = 'scoped memory for tpu_custom_call.1']
    %20 = vsyncpa [#allocation3], 0
    %21 = vsyncpa [#allocation6], 0
    %22 = vsyncpa [#allocation9], 0
    %23 = vsyncpa [#allocation12], 0
    %24 = vsyncpa [#allocation4], 0
    %25 = vsyncpa [#allocation16], 0
    // Predicated region
    $region2: #{tpu_custom_call.1} parent=1 // pred_check
      _
    $region3: #{tpu_custom_call.1} parent=1 // pred_check_branch
      %27 = sbr.rel (0) target = $region5
    $region4: #{tpu_custom_call.1} parent=1 // pred_region
      %s29 = ssub.s32 128, 128
      %30 = vsyncadd [#allocation3], %s29
      %s32 = sshll.u32 [#allocation2], 4
      %s33 = int_to_ptr.vmem [resolvable:$true] %s32
      %35 = dma.hbm_to_vmem [thread:$0]  %s0, 128, %s33, [#allocation3]
    $region5: #{tpu_custom_call.1} parent=1 // pred_fallthru
      _
    // Predicated region
    $region6: #{tpu_custom_call.1} parent=1 // pred_check
      _
    $region7: #{tpu_custom_call.1} parent=1 // pred_check_branch
      %37 = sbr.rel (0) target = $region9
    $region8: #{tpu_custom_call.1} parent=1 // pred_region
      %s39 = ssub.s32 2048, 2048
      %40 = vsyncadd [#allocation6], %s39
      %s41 = sshll.u32 [#allocation5], 4
      %s42 = int_to_ptr.vmem [resolvable:$true] %s41
      %47 = dma.hbm_to_vmem [thread:$0]  %s1, 2048, %s42, [#allocation6], 128, 128, 8
    $region9: #{tpu_custom_call.1} parent=1 // pred_fallthru
      _
    // Predicated region
    $region10: #{tpu_custom_call.1} parent=1 // pred_check
      _
    $region11: #{tpu_custom_call.1} parent=1 // pred_check_branch
      %49 = sbr.rel (0) target = $region13
    $region12: #{tpu_custom_call.1} parent=1 // pred_region
      _
    $region13: #{tpu_custom_call.1} parent=1 // pred_fallthru
      _
    // Predicated region
    $region14: #{tpu_custom_call.1} parent=1 // pred_check
      _
    $region15: #{tpu_custom_call.1} parent=1 // pred_check_branch
      %51 = sbr.rel (0) target = $region17
    $region16: #{tpu_custom_call.1} parent=1 // pred_region
      %s53 = ssub.s32 2048, 2048
      %54 = vsyncadd [#allocation6], %s53
      %s55 = sshll.u32 [#allocation7], 4
      %s56 = int_to_ptr.vmem [resolvable:$true] %s55
      %61 = dma.hbm_to_vmem [thread:$0]  %s3, 2048, %s56, [#allocation6], 128, 128, 8
    $region17: #{tpu_custom_call.1} parent=1 // pred_fallthru
      _
    // Predicated region
    $region18: #{tpu_custom_call.1} parent=1 // pred_check
      _
    $region19: #{tpu_custom_call.1} parent=1 // pred_check_branch
      %63 = sbr.rel (0) target = $region21
    $region20: #{tpu_custom_call.1} parent=1 // pred_region
      _
    $region21: #{tpu_custom_call.1} parent=1 // pred_fallthru
      _
    // Predicated region
    $region22: #{tpu_custom_call.1} parent=1 // pred_check
      _
    $region23: #{tpu_custom_call.1} parent=1 // pred_check_branch
      %65 = sbr.rel (0) target = $region25
    $region24: #{tpu_custom_call.1} parent=1 // pred_region
      %s67 = ssub.s32 2048, 2048
      %68 = vsyncadd [#allocation9], %s67
      %s69 = sshll.u32 [#allocation8], 4
      %s70 = int_to_ptr.vmem [resolvable:$true] %s69
      %75 = dma.hbm_to_vmem [thread:$0]  %s5, 2048, %s70, [#allocation9], 128, 128, 8
    $region25: #{tpu_custom_call.1} parent=1 // pred_fallthru
      _
    // Predicated region
    $region26: #{tpu_custom_call.1} parent=1 // pred_check
      _
    $region27: #{tpu_custom_call.1} parent=1 // pred_check_branch
      %77 = sbr.rel (0) target = $region29
    $region28: #{tpu_custom_call.1} parent=1 // pred_region
      _
    $region29: #{tpu_custom_call.1} parent=1 // pred_fallthru
      _
    // Predicated region
    $region30: #{tpu_custom_call.1} parent=1 // pred_check
      _
    $region31: #{tpu_custom_call.1} parent=1 // pred_check_branch
      %79 = sbr.rel (0) target = $region33
    $region32: #{tpu_custom_call.1} parent=1 // pred_region
      %s81 = ssub.s32 2048, 2048
      %82 = vsyncadd [#allocation9], %s81
      %s83 = sshll.u32 [#allocation10], 4
      %s84 = int_to_ptr.vmem [resolvable:$true] %s83
      %89 = dma.hbm_to_vmem [thread:$0]  %s7, 2048, %s84, [#allocation9], 128, 128, 8
    $region33: #{tpu_custom_call.1} parent=1 // pred_fallthru
      _
    // Predicated region
    $region34: #{tpu_custom_call.1} parent=1 // pred_check
      _
    $region35: #{tpu_custom_call.1} parent=1 // pred_check_branch
      %91 = sbr.rel (0) target = $region37
    $region36: #{tpu_custom_call.1} parent=1 // pred_region
      _
    $region37: #{tpu_custom_call.1} parent=1 // pred_fallthru
      _
    // Predicated region
    $region38: #{tpu_custom_call.1} parent=1 // pred_check
      _
    $region39: #{tpu_custom_call.1} parent=1 // pred_check_branch
      %93 = sbr.rel (0) target = $region41
    $region40: #{tpu_custom_call.1} parent=1 // pred_region
      %s95 = ssub.s32 2048, 2048
      %96 = vsyncadd [#allocation12], %s95
      %s97 = sshll.u32 [#allocation11], 4
      %s98 = int_to_ptr.vmem [resolvable:$true] %s97
      %103 = dma.hbm_to_vmem [thread:$0]  %s9, 2048, %s98, [#allocation12], 128, 128, 8
    $region41: #{tpu_custom_call.1} parent=1 // pred_fallthru
      _
    // Predicated region
    $region42: #{tpu_custom_call.1} parent=1 // pred_check
      _
    $region43: #{tpu_custom_call.1} parent=1 // pred_check_branch
      %105 = sbr.rel (0) target = $region45
    $region44: #{tpu_custom_call.1} parent=1 // pred_region
      _
    $region45: #{tpu_custom_call.1} parent=1 // pred_fallthru
      _
    // Predicated region
    $region46: #{tpu_custom_call.1} parent=1 // pred_check
      _
    $region47: #{tpu_custom_call.1} parent=1 // pred_check_branch
      %107 = sbr.rel (0) target = $region49
    $region48: #{tpu_custom_call.1} parent=1 // pred_region
      %s109 = ssub.s32 2048, 2048
      %110 = vsyncadd [#allocation12], %s109
      %s111 = sshll.u32 [#allocation13], 4
      %s112 = int_to_ptr.vmem [resolvable:$true] %s111
      %117 = dma.hbm_to_vmem [thread:$0]  %s11, 2048, %s112, [#allocation12], 128, 128, 8
    $region49: #{tpu_custom_call.1} parent=1 // pred_fallthru
      _
    // Predicated region
    $region50: #{tpu_custom_call.1} parent=1 // pred_check
      _
    $region51: #{tpu_custom_call.1} parent=1 // pred_check_branch
      %119 = sbr.rel (0) target = $region53
    $region52: #{tpu_custom_call.1} parent=1 // pred_region
      _
    $region53: #{tpu_custom_call.1} parent=1 // pred_fallthru
      _
    // Predicated region
    $region54: #{tpu_custom_call.1} parent=1 // pred_check
      _
    $region55: #{tpu_custom_call.1} parent=1 // pred_check_branch
      %121 = sbr.rel (0) target = $region57
    $region56: #{tpu_custom_call.1} parent=1 // pred_region
      %122 = dma.done [#allocation3], 128
    $region57: #{tpu_custom_call.1} parent=1 // pred_fallthru
      _
    // Predicated region
    $region58: #{tpu_custom_call.1} parent=1 // pred_check
      _
    $region59: #{tpu_custom_call.1} parent=1 // pred_check_branch
      %124 = sbr.rel (0) target = $region61
    $region60: #{tpu_custom_call.1} parent=1 // pred_region
      %125 = dma.done [#allocation6], 2048
    $region61: #{tpu_custom_call.1} parent=1 // pred_fallthru
      _
    // Predicated region
    $region62: #{tpu_custom_call.1} parent=1 // pred_check
      _
    $region63: #{tpu_custom_call.1} parent=1 // pred_check_branch
      %127 = sbr.rel (0) target = $region65
    $region64: #{tpu_custom_call.1} parent=1 // pred_region
      %128 = dma.done [#allocation6], 2048
    $region65: #{tpu_custom_call.1} parent=1 // pred_fallthru
      _
    // Predicated region
    $region66: #{tpu_custom_call.1} parent=1 // pred_check
      _
    $region67: #{tpu_custom_call.1} parent=1 // pred_check_branch
      %130 = sbr.rel (0) target = $region69
    $region68: #{tpu_custom_call.1} parent=1 // pred_region
      %131 = dma.done [#allocation9], 2048
    $region69: #{tpu_custom_call.1} parent=1 // pred_fallthru
      _
    // Predicated region
    $region70: #{tpu_custom_call.1} parent=1 // pred_check
      _
    $region71: #{tpu_custom_call.1} parent=1 // pred_check_branch
      %133 = sbr.rel (0) target = $region73
    $region72: #{tpu_custom_call.1} parent=1 // pred_region
      %134 = dma.done [#allocation9], 2048
    $region73: #{tpu_custom_call.1} parent=1 // pred_fallthru
      _
    // Predicated region
    $region74: #{tpu_custom_call.1} parent=1 // pred_check
      _
    $region75: #{tpu_custom_call.1} parent=1 // pred_check_branch
      %136 = sbr.rel (0) target = $region77
    $region76: #{tpu_custom_call.1} parent=1 // pred_region
      %137 = dma.done [#allocation12], 2048
    $region77: #{tpu_custom_call.1} parent=1 // pred_fallthru
      _
    // Predicated region
    $region78: #{tpu_custom_call.1} parent=1 // pred_check
      _
    $region79: #{tpu_custom_call.1} parent=1 // pred_check_branch
      %139 = sbr.rel (0) target = $region81
    $region80: #{tpu_custom_call.1} parent=1 // pred_region
      %140 = dma.done [#allocation12], 2048
    $region81: #{tpu_custom_call.1} parent=1 // pred_fallthru
      _
    %v141 = vld [vmem:[#allocation2] sm:$0xff]
    %v142 = vld [vmem:[#allocation5] sm:$0xff]
    %v143 = vld [vmem:[#allocation5 + $0x8] sm:$0xff]
    %v144 = vld [vmem:[#allocation5 + $0x10] sm:$0xff]
    %v145 = vld [vmem:[#allocation5 + $0x18] sm:$0xff]
    %v146 = vld [vmem:[#allocation5 + $0x20] sm:$0xff]
    %v147 = vld [vmem:[#allocation5 + $0x28] sm:$0xff]
    %v148 = vld [vmem:[#allocation5 + $0x30] sm:$0xff]
    %v149 = vld [vmem:[#allocation5 + $0x38] sm:$0xff]
    %v150 = vld [vmem:[#allocation5 + $0x40] sm:$0xff]
    %v151 = vld [vmem:[#allocation5 + $0x48] sm:$0xff]
    %v152 = vld [vmem:[#allocation5 + $0x50] sm:$0xff]
    %v153 = vld [vmem:[#allocation5 + $0x58] sm:$0xff]
    %v154 = vld [vmem:[#allocation5 + $0x60] sm:$0xff]
    %v155 = vld [vmem:[#allocation5 + $0x68] sm:$0xff]
    %v156 = vld [vmem:[#allocation5 + $0x70] sm:$0xff]
    %v157 = vld [vmem:[#allocation5 + $0x78] sm:$0xff]
    %v158 = vld [vmem:[%s2] sm:$0x1]
    %v160 = vlaneseq
    %v161 = vshrl.u32 %v160, 7
    %v162 = vsub.s32 0, %v161
    %v163 = vrot.slane %v158, %v162
    %165 = vmatprep.subr.mxu0 0.0
    %166 = vmatpush1.msra.mxu0 %v157
    %167 = vmatprep.subr.mxu0 0.0
    %168 = vmatpush1.msra.mxu0 %v156
    %169 = vmatprep.subr.mxu0 0.0
    %170 = vmatpush1.msra.mxu0 %v155
    %171 = vmatprep.subr.mxu0 0.0
    %172 = vmatpush1.msra.mxu0 %v154
    %173 = vmatprep.subr.mxu0 0.0
    %174 = vmatpush1.msra.mxu0 %v153
    %175 = vmatprep.subr.mxu0 0.0
    %176 = vmatpush1.msra.mxu0 %v152
    %177 = vmatprep.subr.mxu0 0.0
    %178 = vmatpush1.msra.mxu0 %v151
    %179 = vmatprep.subr.mxu0 0.0
    %180 = vmatpush1.msra.mxu0 %v150
    %181 = vmatprep.subr.mxu0 0.0
    %182 = vmatpush1.msra.mxu0 %v149
    %183 = vmatprep.subr.mxu0 0.0
    %184 = vmatpush1.msra.mxu0 %v148
    %185 = vmatprep.subr.mxu0 0.0
    %186 = vmatpush1.msra.mxu0 %v147
    %187 = vmatprep.subr.mxu0 0.0
    %188 = vmatpush1.msra.mxu0 %v146
    %189 = vmatprep.subr.mxu0 0.0
    %190 = vmatpush1.msra.mxu0 %v145
    %191 = vmatprep.subr.mxu0 0.0
    %192 = vmatpush1.msra.mxu0 %v144
    %193 = vmatprep.subr.mxu0 0.0
    %194 = vmatpush1.msra.mxu0 %v143
    %195 = vmatprep.subr.mxu0 0.0
    %196 = vmatpush1.msra.mxu0 %v142
    %197 = vmatprep.subr.mxu0 0.0
    %198 = vmatpush2.msra.mxu0 0.0
    %199 = vmatprep.subr.mxu0 0.0
    %200 = vmatpush2.msra.mxu0 0.0
    %201 = vmatprep.subr.mxu0 0.0
    %202 = vmatpush2.msra.mxu0 0.0
    %203 = vmatprep.subr.mxu0 0.0
    %204 = vmatpush2.msra.mxu0 0.0
    %205 = vmatprep.subr.mxu0 0.0
    %206 = vmatpush2.msra.mxu0 0.0
    %207 = vmatprep.subr.mxu0 0.0
    %208 = vmatpush2.msra.mxu0 0.0
    %209 = vmatprep.subr.mxu0 0.0
    %210 = vmatpush2.msra.mxu0 0.0
    %211 = vmatprep.subr.mxu0 0.0
    %212 = vmatpush2.msra.mxu0 0.0
    %213 = vmatprep.subr.mxu0 0.0
    %214 = vmatpush2.msra.mxu0 0.0
    %215 = vmatprep.subr.mxu0 0.0
    %216 = vmatpush2.msra.mxu0 0.0
    %217 = vmatprep.subr.mxu0 0.0
    %218 = vmatpush2.msra.mxu0 0.0
    %219 = vmatprep.subr.mxu0 0.0
    %220 = vmatpush2.msra.mxu0 0.0
    %221 = vmatprep.subr.mxu0 0.0
    %222 = vmatpush2.msra.mxu0 0.0
    %223 = vmatprep.subr.mxu0 0.0
    %224 = vmatpush2.msra.mxu0 0.0
    %225 = vmatprep.subr.mxu0 0.0
    %226 = vmatpush2.msra.mxu0 0.0
    %227 = vmatprep.subr.mxu0 0.0
    %228 = vmatpush2.msra.mxu0 0.0
    %229 = vmatprep.mubr.f32.mxu0 0.0
    %230 = vmatmul.mubr.f32.gmra.mxu0 %v141
    %v231 = vpop.f32.mrf.mxu0
    %v232 = vadd.f32 %v163, %v231
    %v233 = vpop.f32.mrf.mxu0
    %234 = vdwg.mxu0
    %v235 = vmax.f32 %v232, 0.0
    %v236 = vld [vmem:[#allocation7] sm:$0xff]
    %v237 = vld [vmem:[#allocation7 + $0x8] sm:$0xff]
    %v238 = vld [vmem:[#allocation7 + $0x10] sm:$0xff]
    %v239 = vld [vmem:[#allocation7 + $0x18] sm:$0xff]
    %v240 = vld [vmem:[#allocation7 + $0x20] sm:$0xff]
    %v241 = vld [vmem:[#allocation7 + $0x28] sm:$0xff]
    %v242 = vld [vmem:[#allocation7 + $0x30] sm:$0xff]
    %v243 = vld [vmem:[#allocation7 + $0x38] sm:$0xff]
    %v244 = vld [vmem:[#allocation7 + $0x40] sm:$0xff]
    %v245 = vld [vmem:[#allocation7 + $0x48] sm:$0xff]
    %v246 = vld [vmem:[#allocation7 + $0x50] sm:$0xff]
    %v247 = vld [vmem:[#allocation7 + $0x58] sm:$0xff]
    %v248 = vld [vmem:[#allocation7 + $0x60] sm:$0xff]
    %v249 = vld [vmem:[#allocation7 + $0x68] sm:$0xff]
    %v250 = vld [vmem:[#allocation7 + $0x70] sm:$0xff]
    %v251 = vld [vmem:[#allocation7 + $0x78] sm:$0xff]
    %v252 = vld [vmem:[%s4] sm:$0x1]
    %v254 = vlaneseq
    %v255 = vshrl.u32 %v254, 7
    %v256 = vsub.s32 0, %v255
    %v257 = vrot.slane %v252, %v256
    %259 = vmatprep.subr.mxu0 0.0
    %260 = vmatpush1.msra.mxu0 %v251
    %261 = vmatprep.subr.mxu0 0.0
    %262 = vmatpush1.msra.mxu0 %v250
    %263 = vmatprep.subr.mxu0 0.0
    %264 = vmatpush1.msra.mxu0 %v249
    %265 = vmatprep.subr.mxu0 0.0
    %266 = vmatpush1.msra.mxu0 %v248
    %267 = vmatprep.subr.mxu0 0.0
    %268 = vmatpush1.msra.mxu0 %v247
    %269 = vmatprep.subr.mxu0 0.0
    %270 = vmatpush1.msra.mxu0 %v246
    %271 = vmatprep.subr.mxu0 0.0
    %272 = vmatpush1.msra.mxu0 %v245
    %273 = vmatprep.subr.mxu0 0.0
    %274 = vmatpush1.msra.mxu0 %v244
    %275 = vmatprep.subr.mxu0 0.0
    %276 = vmatpush1.msra.mxu0 %v243
    %277 = vmatprep.subr.mxu0 0.0
    %278 = vmatpush1.msra.mxu0 %v242
    %279 = vmatprep.subr.mxu0 0.0
    %280 = vmatpush1.msra.mxu0 %v241
    %281 = vmatprep.subr.mxu0 0.0
    %282 = vmatpush1.msra.mxu0 %v240
    %283 = vmatprep.subr.mxu0 0.0
    %284 = vmatpush1.msra.mxu0 %v239
    %285 = vmatprep.subr.mxu0 0.0
    %286 = vmatpush1.msra.mxu0 %v238
    %287 = vmatprep.subr.mxu0 0.0
    %288 = vmatpush1.msra.mxu0 %v237
    %289 = vmatprep.subr.mxu0 0.0
    %290 = vmatpush1.msra.mxu0 %v236
    %291 = vmatprep.subr.mxu0 0.0
    %292 = vmatpush2.msra.mxu0 0.0
    %293 = vmatprep.subr.mxu0 0.0
    %294 = vmatpush2.msra.mxu0 0.0
    %295 = vmatprep.subr.mxu0 0.0
    %296 = vmatpush2.msra.mxu0 0.0
    %297 = vmatprep.subr.mxu0 0.0
    %298 = vmatpush2.msra.mxu0 0.0
    %299 = vmatprep.subr.mxu0 0.0
    %300 = vmatpush2.msra.mxu0 0.0
    %301 = vmatprep.subr.mxu0 0.0
    %302 = vmatpush2.msra.mxu0 0.0
    %303 = vmatprep.subr.mxu0 0.0
    %304 = vmatpush2.msra.mxu0 0.0
    %305 = vmatprep.subr.mxu0 0.0
    %306 = vmatpush2.msra.mxu0 0.0
    %307 = vmatprep.subr.mxu0 0.0
    %308 = vmatpush2.msra.mxu0 0.0
    %309 = vmatprep.subr.mxu0 0.0
    %310 = vmatpush2.msra.mxu0 0.0
    %311 = vmatprep.subr.mxu0 0.0
    %312 = vmatpush2.msra.mxu0 0.0
    %313 = vmatprep.subr.mxu0 0.0
    %314 = vmatpush2.msra.mxu0 0.0
    %315 = vmatprep.subr.mxu0 0.0
    %316 = vmatpush2.msra.mxu0 0.0
    %317 = vmatprep.subr.mxu0 0.0
    %318 = vmatpush2.msra.mxu0 0.0
    %319 = vmatprep.subr.mxu0 0.0
    %320 = vmatpush2.msra.mxu0 0.0
    %321 = vmatprep.subr.mxu0 0.0
    %322 = vmatpush2.msra.mxu0 0.0
    %323 = vmatprep.mubr.f32.mxu0 0.0
    %324 = vmatmul.mubr.f32.gmra.mxu0 %v235
    %v325 = vpop.f32.mrf.mxu0
    %v326 = vadd.f32 %v257, %v325
    %v327 = vpop.f32.mrf.mxu0
    %328 = vdwg.mxu0
    %v329 = vmax.f32 %v326, 0.0
    %v330 = vld [vmem:[#allocation8] sm:$0xff]
    %v331 = vld [vmem:[#allocation8 + $0x8] sm:$0xff]
    %v332 = vld [vmem:[#allocation8 + $0x10] sm:$0xff]
    %v333 = vld [vmem:[#allocation8 + $0x18] sm:$0xff]
    %v334 = vld [vmem:[#allocation8 + $0x20] sm:$0xff]
    %v335 = vld [vmem:[#allocation8 + $0x28] sm:$0xff]
    %v336 = vld [vmem:[#allocation8 + $0x30] sm:$0xff]
    %v337 = vld [vmem:[#allocation8 + $0x38] sm:$0xff]
    %v338 = vld [vmem:[#allocation8 + $0x40] sm:$0xff]
    %v339 = vld [vmem:[#allocation8 + $0x48] sm:$0xff]
    %v340 = vld [vmem:[#allocation8 + $0x50] sm:$0xff]
    %v341 = vld [vmem:[#allocation8 + $0x58] sm:$0xff]
    %v342 = vld [vmem:[#allocation8 + $0x60] sm:$0xff]
    %v343 = vld [vmem:[#allocation8 + $0x68] sm:$0xff]
    %v344 = vld [vmem:[#allocation8 + $0x70] sm:$0xff]
    %v345 = vld [vmem:[#allocation8 + $0x78] sm:$0xff]
    %v346 = vld [vmem:[%s6] sm:$0x1]
    %v348 = vlaneseq
    %v349 = vshrl.u32 %v348, 7
    %v350 = vsub.s32 0, %v349
    %v351 = vrot.slane %v346, %v350
    %353 = vmatprep.subr.mxu0 0.0
    %354 = vmatpush1.msra.mxu0 %v345
    %355 = vmatprep.subr.mxu0 0.0
    %356 = vmatpush1.msra.mxu0 %v344
    %357 = vmatprep.subr.mxu0 0.0
    %358 = vmatpush1.msra.mxu0 %v343
    %359 = vmatprep.subr.mxu0 0.0
    %360 = vmatpush1.msra.mxu0 %v342
    %361 = vmatprep.subr.mxu0 0.0
    %362 = vmatpush1.msra.mxu0 %v341
    %363 = vmatprep.subr.mxu0 0.0
    %364 = vmatpush1.msra.mxu0 %v340
    %365 = vmatprep.subr.mxu0 0.0
    %366 = vmatpush1.msra.mxu0 %v339
    %367 = vmatprep.subr.mxu0 0.0
    %368 = vmatpush1.msra.mxu0 %v338
    %369 = vmatprep.subr.mxu0 0.0
    %370 = vmatpush1.msra.mxu0 %v337
    %371 = vmatprep.subr.mxu0 0.0
    %372 = vmatpush1.msra.mxu0 %v336
    %373 = vmatprep.subr.mxu0 0.0
    %374 = vmatpush1.msra.mxu0 %v335
    %375 = vmatprep.subr.mxu0 0.0
    %376 = vmatpush1.msra.mxu0 %v334
    %377 = vmatprep.subr.mxu0 0.0
    %378 = vmatpush1.msra.mxu0 %v333
    %379 = vmatprep.subr.mxu0 0.0
    %380 = vmatpush1.msra.mxu0 %v332
    %381 = vmatprep.subr.mxu0 0.0
    %382 = vmatpush1.msra.mxu0 %v331
    %383 = vmatprep.subr.mxu0 0.0
    %384 = vmatpush1.msra.mxu0 %v330
    %385 = vmatprep.subr.mxu0 0.0
    %386 = vmatpush2.msra.mxu0 0.0
    %387 = vmatprep.subr.mxu0 0.0
    %388 = vmatpush2.msra.mxu0 0.0
    %389 = vmatprep.subr.mxu0 0.0
    %390 = vmatpush2.msra.mxu0 0.0
    %391 = vmatprep.subr.mxu0 0.0
    %392 = vmatpush2.msra.mxu0 0.0
    %393 = vmatprep.subr.mxu0 0.0
    %394 = vmatpush2.msra.mxu0 0.0
    %395 = vmatprep.subr.mxu0 0.0
    %396 = vmatpush2.msra.mxu0 0.0
    %397 = vmatprep.subr.mxu0 0.0
    %398 = vmatpush2.msra.mxu0 0.0
    %399 = vmatprep.subr.mxu0 0.0
    %400 = vmatpush2.msra.mxu0 0.0
    %401 = vmatprep.subr.mxu0 0.0
    %402 = vmatpush2.msra.mxu0 0.0
    %403 = vmatprep.subr.mxu0 0.0
    %404 = vmatpush2.msra.mxu0 0.0
    %405 = vmatprep.subr.mxu0 0.0
    %406 = vmatpush2.msra.mxu0 0.0
    %407 = vmatprep.subr.mxu0 0.0
    %408 = vmatpush2.msra.mxu0 0.0
    %409 = vmatprep.subr.mxu0 0.0
    %410 = vmatpush2.msra.mxu0 0.0
    %411 = vmatprep.subr.mxu0 0.0
    %412 = vmatpush2.msra.mxu0 0.0
    %413 = vmatprep.subr.mxu0 0.0
    %414 = vmatpush2.msra.mxu0 0.0
    %415 = vmatprep.subr.mxu0 0.0
    %416 = vmatpush2.msra.mxu0 0.0
    %417 = vmatprep.mubr.f32.mxu0 0.0
    %418 = vmatmul.mubr.f32.gmra.mxu0 %v329
    %v419 = vpop.f32.mrf.mxu0
    %v420 = vadd.f32 %v351, %v419
    %v421 = vpop.f32.mrf.mxu0
    %422 = vdwg.mxu0
    %423 = vst [vmem:[#allocation15] sm:$0xff] %v420
    %v424 = vld [vmem:[#allocation10] sm:$0xff]
    %v425 = vld [vmem:[#allocation10 + $0x8] sm:$0xff]
    %v426 = vld [vmem:[#allocation10 + $0x10] sm:$0xff]
    %v427 = vld [vmem:[#allocation10 + $0x18] sm:$0xff]
    %v428 = vld [vmem:[#allocation10 + $0x20] sm:$0xff]
    %v429 = vld [vmem:[#allocation10 + $0x28] sm:$0xff]
    %v430 = vld [vmem:[#allocation10 + $0x30] sm:$0xff]
    %v431 = vld [vmem:[#allocation10 + $0x38] sm:$0xff]
    %v432 = vld [vmem:[#allocation10 + $0x40] sm:$0xff]
    %v433 = vld [vmem:[#allocation10 + $0x48] sm:$0xff]
    %v434 = vld [vmem:[#allocation10 + $0x50] sm:$0xff]
    %v435 = vld [vmem:[#allocation10 + $0x58] sm:$0xff]
    %v436 = vld [vmem:[#allocation10 + $0x60] sm:$0xff]
    %v437 = vld [vmem:[#allocation10 + $0x68] sm:$0xff]
    %v438 = vld [vmem:[#allocation10 + $0x70] sm:$0xff]
    %v439 = vld [vmem:[#allocation10 + $0x78] sm:$0xff]
    %v440 = vld [vmem:[%s8] sm:$0x1]
    %v442 = vlaneseq
    %v443 = vshrl.u32 %v442, 7
    %v444 = vsub.s32 0, %v443
    %v445 = vrot.slane %v440, %v444
    %447 = vmatprep.subr.mxu0 0.0
    %448 = vmatpush1.msra.mxu0 %v439
    %449 = vmatprep.subr.mxu0 0.0
    %450 = vmatpush1.msra.mxu0 %v438
    %451 = vmatprep.subr.mxu0 0.0
    %452 = vmatpush1.msra.mxu0 %v437
    %453 = vmatprep.subr.mxu0 0.0
    %454 = vmatpush1.msra.mxu0 %v436
    %455 = vmatprep.subr.mxu0 0.0
    %456 = vmatpush1.msra.mxu0 %v435
    %457 = vmatprep.subr.mxu0 0.0
    %458 = vmatpush1.msra.mxu0 %v434
    %459 = vmatprep.subr.mxu0 0.0
    %460 = vmatpush1.msra.mxu0 %v433
    %461 = vmatprep.subr.mxu0 0.0
    %462 = vmatpush1.msra.mxu0 %v432
    %463 = vmatprep.subr.mxu0 0.0
    %464 = vmatpush1.msra.mxu0 %v431
    %465 = vmatprep.subr.mxu0 0.0
    %466 = vmatpush1.msra.mxu0 %v430
    %467 = vmatprep.subr.mxu0 0.0
    %468 = vmatpush1.msra.mxu0 %v429
    %469 = vmatprep.subr.mxu0 0.0
    %470 = vmatpush1.msra.mxu0 %v428
    %471 = vmatprep.subr.mxu0 0.0
    %472 = vmatpush1.msra.mxu0 %v427
    %473 = vmatprep.subr.mxu0 0.0
    %474 = vmatpush1.msra.mxu0 %v426
    %475 = vmatprep.subr.mxu0 0.0
    %476 = vmatpush1.msra.mxu0 %v425
    %477 = vmatprep.subr.mxu0 0.0
    %478 = vmatpush1.msra.mxu0 %v424
    %479 = vmatprep.subr.mxu0 0.0
    %480 = vmatpush2.msra.mxu0 0.0
    %481 = vmatprep.subr.mxu0 0.0
    %482 = vmatpush2.msra.mxu0 0.0
    %483 = vmatprep.subr.mxu0 0.0
    %484 = vmatpush2.msra.mxu0 0.0
    %485 = vmatprep.subr.mxu0 0.0
    %486 = vmatpush2.msra.mxu0 0.0
    %487 = vmatprep.subr.mxu0 0.0
    %488 = vmatpush2.msra.mxu0 0.0
    %489 = vmatprep.subr.mxu0 0.0
    %490 = vmatpush2.msra.mxu0 0.0
    %491 = vmatprep.subr.mxu0 0.0
    %492 = vmatpush2.msra.mxu0 0.0
    %493 = vmatprep.subr.mxu0 0.0
    %494 = vmatpush2.msra.mxu0 0.0
    %495 = vmatprep.subr.mxu0 0.0
    %496 = vmatpush2.msra.mxu0 0.0
    %497 = vmatprep.subr.mxu0 0.0
    %498 = vmatpush2.msra.mxu0 0.0
    %499 = vmatprep.subr.mxu0 0.0
    %500 = vmatpush2.msra.mxu0 0.0
    %501 = vmatprep.subr.mxu0 0.0
    %502 = vmatpush2.msra.mxu0 0.0
    %503 = vmatprep.subr.mxu0 0.0
    %504 = vmatpush2.msra.mxu0 0.0
    %505 = vmatprep.subr.mxu0 0.0
    %506 = vmatpush2.msra.mxu0 0.0
    %507 = vmatprep.subr.mxu0 0.0
    %508 = vmatpush2.msra.mxu0 0.0
    %509 = vmatprep.subr.mxu0 0.0
    %510 = vmatpush2.msra.mxu0 0.0
    %511 = vmatprep.mubr.f32.mxu0 0.0
    %512 = vmatmul.mubr.f32.gmra.mxu0 %v420
    %v513 = vpop.f32.mrf.mxu0
    %v514 = vadd.f32 %v445, %v513
    %v515 = vpop.f32.mrf.mxu0
    %516 = vdwg.mxu0
    %v517 = vmax.f32 %v514, 0.0
    %v518 = vld [vmem:[#allocation11] sm:$0xff]
    %v519 = vld [vmem:[#allocation11 + $0x8] sm:$0xff]
    %v520 = vld [vmem:[#allocation11 + $0x10] sm:$0xff]
    %v521 = vld [vmem:[#allocation11 + $0x18] sm:$0xff]
    %v522 = vld [vmem:[#allocation11 + $0x20] sm:$0xff]
    %v523 = vld [vmem:[#allocation11 + $0x28] sm:$0xff]
    %v524 = vld [vmem:[#allocation11 + $0x30] sm:$0xff]
    %v525 = vld [vmem:[#allocation11 + $0x38] sm:$0xff]
    %v526 = vld [vmem:[#allocation11 + $0x40] sm:$0xff]
    %v527 = vld [vmem:[#allocation11 + $0x48] sm:$0xff]
    %v528 = vld [vmem:[#allocation11 + $0x50] sm:$0xff]
    %v529 = vld [vmem:[#allocation11 + $0x58] sm:$0xff]
    %v530 = vld [vmem:[#allocation11 + $0x60] sm:$0xff]
    %v531 = vld [vmem:[#allocation11 + $0x68] sm:$0xff]
    %v532 = vld [vmem:[#allocation11 + $0x70] sm:$0xff]
    %v533 = vld [vmem:[#allocation11 + $0x78] sm:$0xff]
    %v534 = vld [vmem:[%s10] sm:$0x1]
    %v536 = vlaneseq
    %v537 = vshrl.u32 %v536, 7
    %v538 = vsub.s32 0, %v537
    %v539 = vrot.slane %v534, %v538
    %541 = vmatprep.subr.mxu0 0.0
    %542 = vmatpush1.msra.mxu0 %v533
    %543 = vmatprep.subr.mxu0 0.0
    %544 = vmatpush1.msra.mxu0 %v532
    %545 = vmatprep.subr.mxu0 0.0
    %546 = vmatpush1.msra.mxu0 %v531
    %547 = vmatprep.subr.mxu0 0.0
    %548 = vmatpush1.msra.mxu0 %v530
    %549 = vmatprep.subr.mxu0 0.0
    %550 = vmatpush1.msra.mxu0 %v529
    %551 = vmatprep.subr.mxu0 0.0
    %552 = vmatpush1.msra.mxu0 %v528
    %553 = vmatprep.subr.mxu0 0.0
    %554 = vmatpush1.msra.mxu0 %v527
    %555 = vmatprep.subr.mxu0 0.0
    %556 = vmatpush1.msra.mxu0 %v526
    %557 = vmatprep.subr.mxu0 0.0
    %558 = vmatpush1.msra.mxu0 %v525
    %559 = vmatprep.subr.mxu0 0.0
    %560 = vmatpush1.msra.mxu0 %v524
    %561 = vmatprep.subr.mxu0 0.0
    %562 = vmatpush1.msra.mxu0 %v523
    %563 = vmatprep.subr.mxu0 0.0
    %564 = vmatpush1.msra.mxu0 %v522
    %565 = vmatprep.subr.mxu0 0.0
    %566 = vmatpush1.msra.mxu0 %v521
    %567 = vmatprep.subr.mxu0 0.0
    %568 = vmatpush1.msra.mxu0 %v520
    %569 = vmatprep.subr.mxu0 0.0
    %570 = vmatpush1.msra.mxu0 %v519
    %571 = vmatprep.subr.mxu0 0.0
    %572 = vmatpush1.msra.mxu0 %v518
    %573 = vmatprep.subr.mxu0 0.0
    %574 = vmatpush2.msra.mxu0 0.0
    %575 = vmatprep.subr.mxu0 0.0
    %576 = vmatpush2.msra.mxu0 0.0
    %577 = vmatprep.subr.mxu0 0.0
    %578 = vmatpush2.msra.mxu0 0.0
    %579 = vmatprep.subr.mxu0 0.0
    %580 = vmatpush2.msra.mxu0 0.0
    %581 = vmatprep.subr.mxu0 0.0
    %582 = vmatpush2.msra.mxu0 0.0
    %583 = vmatprep.subr.mxu0 0.0
    %584 = vmatpush2.msra.mxu0 0.0
    %585 = vmatprep.subr.mxu0 0.0
    %586 = vmatpush2.msra.mxu0 0.0
    %587 = vmatprep.subr.mxu0 0.0
    %588 = vmatpush2.msra.mxu0 0.0
    %589 = vmatprep.subr.mxu0 0.0
    %590 = vmatpush2.msra.mxu0 0.0
    %591 = vmatprep.subr.mxu0 0.0
    %592 = vmatpush2.msra.mxu0 0.0
    %593 = vmatprep.subr.mxu0 0.0
    %594 = vmatpush2.msra.mxu0 0.0
    %595 = vmatprep.subr.mxu0 0.0
    %596 = vmatpush2.msra.mxu0 0.0
    %597 = vmatprep.subr.mxu0 0.0
    %598 = vmatpush2.msra.mxu0 0.0
    %599 = vmatprep.subr.mxu0 0.0
    %600 = vmatpush2.msra.mxu0 0.0
    %601 = vmatprep.subr.mxu0 0.0
    %602 = vmatpush2.msra.mxu0 0.0
    %603 = vmatprep.subr.mxu0 0.0
    %604 = vmatpush2.msra.mxu0 0.0
    %605 = vmatprep.mubr.f32.mxu0 0.0
    %606 = vmatmul.mubr.f32.gmra.mxu0 %v517
    %v607 = vpop.f32.mrf.mxu0
    %v608 = vadd.f32 %v539, %v607
    %v609 = vpop.f32.mrf.mxu0
    %610 = vdwg.mxu0
    %v611 = vmax.f32 %v608, 0.0
    %v612 = vld [vmem:[#allocation13] sm:$0xff]
    %v613 = vld [vmem:[#allocation13 + $0x8] sm:$0xff]
    %v614 = vld [vmem:[#allocation13 + $0x10] sm:$0xff]
    %v615 = vld [vmem:[#allocation13 + $0x18] sm:$0xff]
    %v616 = vld [vmem:[#allocation13 + $0x20] sm:$0xff]
    %v617 = vld [vmem:[#allocation13 + $0x28] sm:$0xff]
    %v618 = vld [vmem:[#allocation13 + $0x30] sm:$0xff]
    %v619 = vld [vmem:[#allocation13 + $0x38] sm:$0xff]
    %v620 = vld [vmem:[#allocation13 + $0x40] sm:$0xff]
    %v621 = vld [vmem:[#allocation13 + $0x48] sm:$0xff]
    %v622 = vld [vmem:[#allocation13 + $0x50] sm:$0xff]
    %v623 = vld [vmem:[#allocation13 + $0x58] sm:$0xff]
    %v624 = vld [vmem:[#allocation13 + $0x60] sm:$0xff]
    %v625 = vld [vmem:[#allocation13 + $0x68] sm:$0xff]
    %v626 = vld [vmem:[#allocation13 + $0x70] sm:$0xff]
    %v627 = vld [vmem:[#allocation13 + $0x78] sm:$0xff]
    %v628 = vld [vmem:[%s12] sm:$0x1]
    %v630 = vlaneseq
    %v631 = vshrl.u32 %v630, 7
    %v632 = vsub.s32 0, %v631
    %v633 = vrot.slane %v628, %v632
    %635 = vmatprep.subr.mxu0 0.0
    %636 = vmatpush1.msra.mxu0 %v627
    %637 = vmatprep.subr.mxu0 0.0
    %638 = vmatpush1.msra.mxu0 %v626
    %639 = vmatprep.subr.mxu0 0.0
    %640 = vmatpush1.msra.mxu0 %v625
    %641 = vmatprep.subr.mxu0 0.0
    %642 = vmatpush1.msra.mxu0 %v624
    %643 = vmatprep.subr.mxu0 0.0
    %644 = vmatpush1.msra.mxu0 %v623
    %645 = vmatprep.subr.mxu0 0.0
    %646 = vmatpush1.msra.mxu0 %v622
    %647 = vmatprep.subr.mxu0 0.0
    %648 = vmatpush1.msra.mxu0 %v621
    %649 = vmatprep.subr.mxu0 0.0
    %650 = vmatpush1.msra.mxu0 %v620
    %651 = vmatprep.subr.mxu0 0.0
    %652 = vmatpush1.msra.mxu0 %v619
    %653 = vmatprep.subr.mxu0 0.0
    %654 = vmatpush1.msra.mxu0 %v618
    %655 = vmatprep.subr.mxu0 0.0
    %656 = vmatpush1.msra.mxu0 %v617
    %657 = vmatprep.subr.mxu0 0.0
    %658 = vmatpush1.msra.mxu0 %v616
    %659 = vmatprep.subr.mxu0 0.0
    %660 = vmatpush1.msra.mxu0 %v615
    %661 = vmatprep.subr.mxu0 0.0
    %662 = vmatpush1.msra.mxu0 %v614
    %663 = vmatprep.subr.mxu0 0.0
    %664 = vmatpush1.msra.mxu0 %v613
    %665 = vmatprep.subr.mxu0 0.0
    %666 = vmatpush1.msra.mxu0 %v612
    %667 = vmatprep.subr.mxu0 0.0
    %668 = vmatpush2.msra.mxu0 0.0
    %669 = vmatprep.subr.mxu0 0.0
    %670 = vmatpush2.msra.mxu0 0.0
    %671 = vmatprep.subr.mxu0 0.0
    %672 = vmatpush2.msra.mxu0 0.0
    %673 = vmatprep.subr.mxu0 0.0
    %674 = vmatpush2.msra.mxu0 0.0
    %675 = vmatprep.subr.mxu0 0.0
    %676 = vmatpush2.msra.mxu0 0.0
    %677 = vmatprep.subr.mxu0 0.0
    %678 = vmatpush2.msra.mxu0 0.0
    %679 = vmatprep.subr.mxu0 0.0
    %680 = vmatpush2.msra.mxu0 0.0
    %681 = vmatprep.subr.mxu0 0.0
    %682 = vmatpush2.msra.mxu0 0.0
    %683 = vmatprep.subr.mxu0 0.0
    %684 = vmatpush2.msra.mxu0 0.0
    %685 = vmatprep.subr.mxu0 0.0
    %686 = vmatpush2.msra.mxu0 0.0
    %687 = vmatprep.subr.mxu0 0.0
    %688 = vmatpush2.msra.mxu0 0.0
    %689 = vmatprep.subr.mxu0 0.0
    %690 = vmatpush2.msra.mxu0 0.0
    %691 = vmatprep.subr.mxu0 0.0
    %692 = vmatpush2.msra.mxu0 0.0
    %693 = vmatprep.subr.mxu0 0.0
    %694 = vmatpush2.msra.mxu0 0.0
    %695 = vmatprep.subr.mxu0 0.0
    %696 = vmatpush2.msra.mxu0 0.0
    %697 = vmatprep.subr.mxu0 0.0
    %698 = vmatpush2.msra.mxu0 0.0
    %699 = vmatprep.mubr.f32.mxu0 0.0
    %700 = vmatmul.mubr.f32.gmra.mxu0 %v611
    %v701 = vpop.f32.mrf.mxu0
    %v702 = vadd.f32 %v633, %v701
    %v703 = vpop.f32.mrf.mxu0
    %704 = vdwg.mxu0
    %v705 = vxor.u32 %v702, 2147483648
    %v706 = vmul.f32 %v705, 1.442695
    %v707 = vpow.pop %v706
    %v708 = vadd.f32 %v707, 1.0
    %v709 = vrcp.pop %v708
    %v710 = vmul.f32 1.0, %v709
    %711 = vst [vmem:[#allocation14] sm:$0xff] %v710
    // Predicated region
    $region82: #{tpu_custom_call.1} parent=1 // pred_check
      _
    $region83: #{tpu_custom_call.1} parent=1 // pred_check_branch
      %713 = sbr.rel (0) target = $region85
    $region84: #{tpu_custom_call.1} parent=1 // pred_region
      %s715 = ssub.s32 128, 128
      %716 = vsyncadd [#allocation4], %s715
      %s718 = sshll.u32 [#allocation14], 4
      %s719 = int_to_ptr.vmem [resolvable:$true] %s718
      %721 = dma.vmem_to_hbm [thread:$0]  %s719, 128, %s13, [#allocation4]
    $region85: #{tpu_custom_call.1} parent=1 // pred_fallthru
      _
    // Predicated region
    $region86: #{tpu_custom_call.1} parent=1 // pred_check
      _
    $region87: #{tpu_custom_call.1} parent=1 // pred_check_branch
      %723 = sbr.rel (0) target = $region89
    $region88: #{tpu_custom_call.1} parent=1 // pred_region
      %s725 = ssub.s32 128, 128
      %726 = vsyncadd [#allocation16], %s725
      %s728 = sshll.u32 [#allocation15], 4
      %s729 = int_to_ptr.vmem [resolvable:$true] %s728
      %731 = dma.vmem_to_hbm [thread:$0]  %s729, 128, %s14, [#allocation16]
    $region89: #{tpu_custom_call.1} parent=1 // pred_fallthru
      _
    // Predicated region
    $region90: #{tpu_custom_call.1} parent=1 // pred_check
      _
    $region91: #{tpu_custom_call.1} parent=1 // pred_check_branch
      %733 = sbr.rel (0) target = $region93
    $region92: #{tpu_custom_call.1} parent=1 // pred_region
      %734 = dma.done [#allocation4], 128
    $region93: #{tpu_custom_call.1} parent=1 // pred_fallthru
      _
    // Predicated region
    $region94: #{tpu_custom_call.1} parent=1 // pred_check
      _
    $region95: #{tpu_custom_call.1} parent=1 // pred_check_branch
      %736 = sbr.rel (0) target = $region97
    $region96: #{tpu_custom_call.1} parent=1 // pred_region
      %737 = dma.done [#allocation16], 128
    $region97: #{tpu_custom_call.1} parent=1 // pred_fallthru
      _
    %738 = vsyncpa [#allocation3], 1
    %739 = vsyncpa [#allocation6], 1
    %740 = vsyncpa [#allocation9], 1
    %741 = vsyncpa [#allocation12], 1
    %742 = vsyncpa [#allocation4], 1
    %743 = vsyncpa [#allocation16], 1

</llo_original>
